<compile_context>
chip_gen: v7x
topology: tpu7x:2x2x1
jax: 0.10.0
libtpu: 0.0.40
codegen_flags: <defaults>
</compile_context>

<pallas_src>
import math
import jax
import jax.numpy as jnp
from jax.experimental import pallas as pl
from jax.experimental.pallas import tpu as pltpu

H1, H2, H3 = 384, 256, 64
LANE = 128
MAX_BLOCK_B = 512  # keeps VMEM footprint ~3 MiB, safe on v5e/v6e/v7x scoped limits


def mlp_softmax_kernel(x_ref,
                       w1_ref, b1_ref,
                       w2_ref, b2_ref,
                       w3_ref, b3_ref,
                       w4_ref, b4_ref,
                       o_ref):
    # Layer 1: Linear + ReLU   (dropout = identity at inference)
    h = jnp.dot(x_ref[...], w1_ref[...], preferred_element_type=jnp.float32)
    h = jnp.maximum(h + b1_ref[...], 0.0).astype(jnp.bfloat16)
    # Layer 2: Linear + ReLU
    h = jnp.dot(h, w2_ref[...], preferred_element_type=jnp.float32)
    h = jnp.maximum(h + b2_ref[...], 0.0).astype(jnp.bfloat16)
    # Layer 3: Linear + ReLU
    h = jnp.dot(h, w3_ref[...], preferred_element_type=jnp.float32)
    h = jnp.maximum(h + b3_ref[...], 0.0).astype(jnp.bfloat16)
    # Output layer: Linear (classifier is lane-padded to 128; pad cols have
    # zero weights and -1e30 bias -> exp() underflows to 0, no softmax impact)
    logits = jnp.dot(h, w4_ref[...], preferred_element_type=jnp.float32) + b4_ref[...]
    # softmax over last dim
    m = jnp.max(logits, axis=-1, keepdims=True)
    e = jnp.exp(logits - m)
    o_ref[...] = e * pl.reciprocal(jnp.sum(e, axis=-1, keepdims=True), approx=True)


def _choose_block_b(B, max_block=MAX_BLOCK_B):
    """Batch tile: >=2 grid blocks when possible (dual-TC on v7x), 128-row
    aligned when large (MXU / store friendly), capped for VMEM safety."""
    if B <= 8:
        return B  # single tiny block equal to the full batch dim
    target = pl.cdiv(B, 2)
    if target >= 128:
        bb = (target // 128) * 128
    else:
        bb = ((target + 7) // 8) * 8
    return min(max_block, max(8, bb))


def prepare_params(params):
    """Cast weights to bf16 (once, outside the kernel) and pad the classifier
    to a lane-dense 128-wide output. Biases stay f32."""
    C = params["w4"].shape[1]
    cp = ((C + LANE - 1) // LANE) * LANE
    w4 = jnp.zeros((H3, cp), jnp.float32).at[:, :C].set(params["w4"])
    b4 = jnp.full((1, cp), -1e30, jnp.float32).at[:, :C].set(params["b4"])
    prepped = {
        "w1": params["w1"].astype(jnp.bfloat16), "b1": params["b1"].astype(jnp.float32),
        "w2": params["w2"].astype(jnp.bfloat16), "b2": params["b2"].astype(jnp.float32),
        "w3": params["w3"].astype(jnp.bfloat16), "b3": params["b3"].astype(jnp.float32),
        "w4": w4.astype(jnp.bfloat16), "b4": b4,
    }
    return prepped, C


def neural_net_classes_forward(x, prepped, num_classes, *, block_b=None):
    """x: [B, F] float32. prepped: output of prepare_params. Returns [B, C] f32."""
    B, F = x.shape
    CP = prepped["w4"].shape[1]
    if block_b is None:
        block_b = _choose_block_b(B)
    n_blocks = pl.cdiv(B, block_b)

    x_bf = x.astype(jnp.bfloat16)  # halves x HBM->VMEM traffic; MXU-native input

    # Constant index_map for the weight/bias operands -> same block every grid
    # step, so their DMAs are hoisted and they stay resident in VMEM.
    full = lambda shape: pl.BlockSpec(shape, lambda i: (0, 0))

    out = pl.pallas_call(
        mlp_softmax_kernel,
        out_shape=jax.ShapeDtypeStruct((B, CP), jnp.float32),
        grid_spec=pltpu.PrefetchScalarGridSpec(
            num_scalar_prefetch=0,
            grid=(n_blocks,),
            in_specs=[
                pl.BlockSpec((block_b, F), lambda i: (i, 0)),   # x tile
                full((F, H1)), full((1, H1)),
                full((H1, H2)), full((1, H2)),
                full((H2, H3)), full((1, H3)),
                full((H3, CP)), full((1, CP)),
            ],
            out_specs=pl.BlockSpec((block_b, CP), lambda i: (i, 0)),
        ),
        compiler_params=pltpu.CompilerParams(
            dimension_semantics=("parallel",)),
    )(x_bf,
      prepped["w1"], prepped["b1"],
      prepped["w2"], prepped["b2"],
      prepped["w3"], prepped["b3"],
      prepped["w4"], prepped["b4"])

    return out[:, :num_classes]


def init_params(key, features, num_classes):
    """Deterministic PyTorch-style (Kaiming-uniform-ish) init; weights are [in, out]."""
    dims = [(features, H1), (H1, H2), (H2, H3), (H3, num_classes)]
    params = {}
    for idx, (fan_in, fan_out) in enumerate(dims, start=1):
        key, kw, kb = jax.random.split(key, 3)
        bound = 1.0 / math.sqrt(fan_in)
        params[f"w{idx}"] = jax.random.uniform(
            kw, (fan_in, fan_out), jnp.float32, -bound, bound)
        params[f"b{idx}"] = jax.random.uniform(
            kb, (1, fan_out), jnp.float32, -bound, bound)
    return params


def reference_forward(x, params):
    """Pure-JAX reference mirroring the kernel's bf16-input / f32-accumulate path."""
    h = x.astype(jnp.bfloat16).astype(jnp.float32)
    for idx in range(1, 4):
        w = params[f"w{idx}"].astype(jnp.bfloat16).astype(jnp.float32)
        h = jnp.maximum(h @ w + params[f"b{idx}"], 0.0)
        h = h.astype(jnp.bfloat16).astype(jnp.float32)
    w4 = params["w4"].astype(jnp.bfloat16).astype(jnp.float32)
    logits = h @ w4 + params["b4"]
    return jax.nn.softmax(logits, axis=-1)


if __name__ == "__main__":
    features, num_classes, batch = 32, 10, 64
    key = jax.random.PRNGKey(0)
    kx, kp = jax.random.split(key)
    x = jax.random.normal(kx, (batch, features), jnp.float32)
    params = init_params(kp, features, num_classes)
    prepped, C = prepare_params(params)

    out = neural_net_classes_forward(x, prepped, C)   # block_b auto -> 32 (2 grid blocks)
    out = jax.block_until_ready(out)

    ref = reference_forward(x, params)
    assert out.shape == (batch, num_classes)
    # approx reciprocal + bf16 matmuls -> slightly relaxed tolerances
    assert jnp.allclose(jnp.sum(out, axis=-1), 1.0, atol=5e-3)
    assert jnp.allclose(out, ref, atol=5e-3, rtol=5e-3)

    print("KERNEL_OK")
</pallas_src>

<mosaic_0001>
module attributes {stable_mosaic.version = 11 : i64} {
  func.func @mlp_softmax_kernel(%arg0: i32, %arg1: memref<32x32xbf16, #tpu.memory_space<vmem>>, %arg2: memref<32x384xbf16, #tpu.memory_space<vmem>>, %arg3: memref<1x384xf32, #tpu.memory_space<vmem>>, %arg4: memref<384x256xbf16, #tpu.memory_space<vmem>>, %arg5: memref<1x256xf32, #tpu.memory_space<vmem>>, %arg6: memref<256x64xbf16, #tpu.memory_space<vmem>>, %arg7: memref<1x64xf32, #tpu.memory_space<vmem>>, %arg8: memref<64x128xbf16, #tpu.memory_space<vmem>>, %arg9: memref<1x128xf32, #tpu.memory_space<vmem>>, %arg10: memref<32x128xf32, #tpu.memory_space<vmem>>) attributes {dimension_semantics = [#tpu.dimension_semantics<parallel>], iteration_bounds = array<i64: 2>, scalar_prefetch = 0 : i64, scratch_operands = 0 : i64, tpu.core_type = #tpu.core_type<tc>, window_params = [{transform_indices = @transform_0, window_bounds = array<i64: 32, 32>}, {pipeline_mode = #tpu.pipeline_mode<synchronous>, transform_indices = @transform_1, window_bounds = array<i64: 32, 384>}, {pipeline_mode = #tpu.pipeline_mode<synchronous>, transform_indices = @transform_2, window_bounds = array<i64: 1, 384>}, {pipeline_mode = #tpu.pipeline_mode<synchronous>, transform_indices = @transform_3, window_bounds = array<i64: 384, 256>}, {pipeline_mode = #tpu.pipeline_mode<synchronous>, transform_indices = @transform_4, window_bounds = array<i64: 1, 256>}, {pipeline_mode = #tpu.pipeline_mode<synchronous>, transform_indices = @transform_5, window_bounds = array<i64: 256, 64>}, {pipeline_mode = #tpu.pipeline_mode<synchronous>, transform_indices = @transform_6, window_bounds = array<i64: 1, 64>}, {pipeline_mode = #tpu.pipeline_mode<synchronous>, transform_indices = @transform_7, window_bounds = array<i64: 64, 128>}, {pipeline_mode = #tpu.pipeline_mode<synchronous>, transform_indices = @transform_8, window_bounds = array<i64: 1, 128>}, {transform_indices = @transform_9, window_bounds = array<i64: 32, 128>}]} {
    %c0 = arith.constant 0 : index
    %c0_0 = arith.constant 0 : index
    %0 = vector.load %arg1[%c0, %c0_0] : memref<32x32xbf16, #tpu.memory_space<vmem>>, vector<32x32xbf16>
    %c0_1 = arith.constant 0 : index
    %c0_2 = arith.constant 0 : index
    %1 = vector.load %arg2[%c0_1, %c0_2] : memref<32x384xbf16, #tpu.memory_space<vmem>>, vector<32x384xbf16>
    %cst = arith.constant dense<0.000000e+00> : vector<32x384xf32>
    %2 = tpu.matmul %0, %1, %cst {dimension_numbers = #tpu.dot_dimension_numbers<[1], [0], [0], [1], [0, 0, 1, 1], [], []>} : vector<32x32xbf16>, vector<32x384xbf16>, vector<32x384xf32> -> vector<32x384xf32>
    %c0_3 = arith.constant 0 : index
    %c0_4 = arith.constant 0 : index
    %3 = vector.load %arg3[%c0_3, %c0_4] : memref<1x384xf32, #tpu.memory_space<vmem>>, vector<1x384xf32>
    %4 = vector.broadcast %3 : vector<1x384xf32> to vector<32x384xf32>
    %5 = arith.addf %2, %4 : vector<32x384xf32>
    %cst_5 = arith.constant 0.000000e+00 : f32
    %6 = vector.broadcast %cst_5 : f32 to vector<32x384xf32>
    %7 = arith.maximumf %5, %6 : vector<32x384xf32>
    %8 = arith.truncf %7 : vector<32x384xf32> to vector<32x384xbf16>
    %c0_6 = arith.constant 0 : index
    %c0_7 = arith.constant 0 : index
    %9 = vector.load %arg4[%c0_6, %c0_7] : memref<384x256xbf16, #tpu.memory_space<vmem>>, vector<384x256xbf16>
    %cst_8 = arith.constant dense<0.000000e+00> : vector<32x256xf32>
    %10 = tpu.matmul %8, %9, %cst_8 {dimension_numbers = #tpu.dot_dimension_numbers<[1], [0], [0], [1], [0, 0, 1, 1], [], []>} : vector<32x384xbf16>, vector<384x256xbf16>, vector<32x256xf32> -> vector<32x256xf32>
    %c0_9 = arith.constant 0 : index
    %c0_10 = arith.constant 0 : index
    %11 = vector.load %arg5[%c0_9, %c0_10] : memref<1x256xf32, #tpu.memory_space<vmem>>, vector<1x256xf32>
    %12 = vector.broadcast %11 : vector<1x256xf32> to vector<32x256xf32>
    %13 = arith.addf %10, %12 : vector<32x256xf32>
    %cst_11 = arith.constant 0.000000e+00 : f32
    %14 = vector.broadcast %cst_11 : f32 to vector<32x256xf32>
    %15 = arith.maximumf %13, %14 : vector<32x256xf32>
    %16 = arith.truncf %15 : vector<32x256xf32> to vector<32x256xbf16>
    %c0_12 = arith.constant 0 : index
    %c0_13 = arith.constant 0 : index
    %17 = vector.load %arg6[%c0_12, %c0_13] : memref<256x64xbf16, #tpu.memory_space<vmem>>, vector<256x64xbf16>
    %cst_14 = arith.constant dense<0.000000e+00> : vector<32x64xf32>
    %18 = tpu.matmul %16, %17, %cst_14 {dimension_numbers = #tpu.dot_dimension_numbers<[1], [0], [0], [1], [0, 0, 1, 1], [], []>} : vector<32x256xbf16>, vector<256x64xbf16>, vector<32x64xf32> -> vector<32x64xf32>
    %c0_15 = arith.constant 0 : index
    %c0_16 = arith.constant 0 : index
    %19 = vector.load %arg7[%c0_15, %c0_16] : memref<1x64xf32, #tpu.memory_space<vmem>>, vector<1x64xf32>
    %20 = vector.broadcast %19 : vector<1x64xf32> to vector<32x64xf32>
    %21 = arith.addf %18, %20 : vector<32x64xf32>
    %cst_17 = arith.constant 0.000000e+00 : f32
    %22 = vector.broadcast %cst_17 : f32 to vector<32x64xf32>
    %23 = arith.maximumf %21, %22 : vector<32x64xf32>
    %24 = arith.truncf %23 : vector<32x64xf32> to vector<32x64xbf16>
    %c0_18 = arith.constant 0 : index
    %c0_19 = arith.constant 0 : index
    %25 = vector.load %arg8[%c0_18, %c0_19] : memref<64x128xbf16, #tpu.memory_space<vmem>>, vector<64x128xbf16>
    %cst_20 = arith.constant dense<0.000000e+00> : vector<32x128xf32>
    %26 = tpu.matmul %24, %25, %cst_20 {dimension_numbers = #tpu.dot_dimension_numbers<[1], [0], [0], [1], [0, 0, 1, 1], [], []>} : vector<32x64xbf16>, vector<64x128xbf16>, vector<32x128xf32> -> vector<32x128xf32>
    %c0_21 = arith.constant 0 : index
    %c0_22 = arith.constant 0 : index
    %27 = vector.load %arg9[%c0_21, %c0_22] : memref<1x128xf32, #tpu.memory_space<vmem>>, vector<1x128xf32>
    %28 = vector.broadcast %27 : vector<1x128xf32> to vector<32x128xf32>
    %29 = arith.addf %26, %28 : vector<32x128xf32>
    %cst_23 = arith.constant dense<0xFF800000> : vector<32xf32>
    %30 = vector.multi_reduction <maximumf>, %29, %cst_23 [1] : vector<32x128xf32> to vector<32xf32>
    %31 = vector.shape_cast %30 : vector<32xf32> to vector<32x1xf32>
    %32 = vector.broadcast %31 : vector<32x1xf32> to vector<32x128xf32>
    %33 = arith.subf %29, %32 : vector<32x128xf32>
    %34 = math.exp %33 : vector<32x128xf32>
    %cst_24 = arith.constant dense<0.000000e+00> : vector<32xf32>
    %35 = vector.multi_reduction <add>, %34, %cst_24 [1] : vector<32x128xf32> to vector<32xf32>
    %36 = vector.shape_cast %35 : vector<32xf32> to vector<32x1xf32>
    %37 = tpu.reciprocal %36 {approx = true} : vector<32x1xf32> -> vector<32x1xf32>
    %38 = vector.broadcast %37 : vector<32x1xf32> to vector<32x128xf32>
    %39 = arith.mulf %34, %38 : vector<32x128xf32>
    %c0_25 = arith.constant 0 : index
    %c0_26 = arith.constant 0 : index
    %40 = vector.load %arg10[%c0_25, %c0_26] : memref<32x128xf32, #tpu.memory_space<vmem>>, vector<32x128xf32>
    tpu.vector_store %arg10[%c0_25, %c0_26], %39 {strides = array<i32>} : memref<32x128xf32, #tpu.memory_space<vmem>>, vector<32x128xf32>,
    return
  }
  func.func @transform_0(%arg0: i32) -> (i32, i32) {
    %c0_i32 = arith.constant 0 : i32
    %c0_i32_0 = arith.constant 0 : i32
    return %arg0, %c0_i32 : i32, i32
  }
  func.func @transform_1(%arg0: i32) -> (i32, i32) {
    %c0_i32 = arith.constant 0 : i32
    %c0_i32_0 = arith.constant 0 : i32
    %c0_i32_1 = arith.constant 0 : i32
    return %c0_i32, %c0_i32_0 : i32, i32
  }
  func.func @transform_2(%arg0: i32) -> (i32, i32) {
    %c0_i32 = arith.constant 0 : i32
    %c0_i32_0 = arith.constant 0 : i32
    %c0_i32_1 = arith.constant 0 : i32
    return %c0_i32, %c0_i32_0 : i32, i32
  }
  func.func @transform_3(%arg0: i32) -> (i32, i32) {
    %c0_i32 = arith.constant 0 : i32
    %c0_i32_0 = arith.constant 0 : i32
    %c0_i32_1 = arith.constant 0 : i32
    return %c0_i32, %c0_i32_0 : i32, i32
  }
  func.func @transform_4(%arg0: i32) -> (i32, i32) {
    %c0_i32 = arith.constant 0 : i32
    %c0_i32_0 = arith.constant 0 : i32
    %c0_i32_1 = arith.constant 0 : i32
    return %c0_i32, %c0_i32_0 : i32, i32
  }
  func.func @transform_5(%arg0: i32) -> (i32, i32) {
    %c0_i32 = arith.constant 0 : i32
    %c0_i32_0 = arith.constant 0 : i32
    %c0_i32_1 = arith.constant 0 : i32
    return %c0_i32, %c0_i32_0 : i32, i32
  }
  func.func @transform_6(%arg0: i32) -> (i32, i32) {
    %c0_i32 = arith.constant 0 : i32
    %c0_i32_0 = arith.constant 0 : i32
    %c0_i32_1 = arith.constant 0 : i32
    return %c0_i32, %c0_i32_0 : i32, i32
  }
  func.func @transform_7(%arg0: i32) -> (i32, i32) {
    %c0_i32 = arith.constant 0 : i32
    %c0_i32_0 = arith.constant 0 : i32
    %c0_i32_1 = arith.constant 0 : i32
    return %c0_i32, %c0_i32_0 : i32, i32
  }
  func.func @transform_8(%arg0: i32) -> (i32, i32) {
    %c0_i32 = arith.constant 0 : i32
    %c0_i32_0 = arith.constant 0 : i32
    %c0_i32_1 = arith.constant 0 : i32
    return %c0_i32, %c0_i32_0 : i32, i32
  }
  func.func @transform_9(%arg0: i32) -> (i32, i32) {
    %c0_i32 = arith.constant 0 : i32
    %c0_i32_0 = arith.constant 0 : i32
    return %arg0, %c0_i32 : i32, i32
  }
}

</mosaic_0001>

<llo_original>
// kernel: tpu_custom_call.1
$region0: #{tpu_custom_call.1}
  #allocation0 [shape = 'u32[]', space=smem, size = 0x4, offset = 0x4, fixed_abs, tag = 'smem constant byte address 0x4 - core index']
  #allocation1 [shape = 'u32[144,128]{1,0:T(1,128)}', space=vmem, size = 0x12000, scoped, tag = 'internal scratch']
  %s0 = inlined_call_operand.vmem [shape: bf16[64,32], index: 0, kind: input, shape index: {}]
  %s1 = inlined_call_operand.vmem [shape: bf16[32,384], index: 1, kind: input, shape index: {}]
  %s2 = inlined_call_operand.vmem [shape: f32[1,384], index: 2, kind: input, shape index: {}]
  %s3 = inlined_call_operand.hbm [shape: bf16[384,256], index: 3, kind: input, shape index: {}]
  %s4 = inlined_call_operand.vmem [shape: f32[1,256], index: 4, kind: input, shape index: {}]
  %s5 = inlined_call_operand.vmem [shape: bf16[256,64], index: 5, kind: input, shape index: {}]
  %s6 = inlined_call_operand.vmem [shape: f32[1,64], index: 6, kind: input, shape index: {}]
  %s7 = inlined_call_operand.vmem [shape: bf16[64,128], index: 7, kind: input, shape index: {}]
  %s8 = inlined_call_operand.vmem [shape: f32[1,128], index: 8, kind: input, shape index: {}]
  %s9 = inlined_call_operand.hbm [shape: f32[64,128], index: 9, kind: output, shape index: {}]
  %s10 = sld [smem:[#allocation0]]
  $region73: #{tpu_custom_call.1} parent=0
    _
  %s12 = ssub.s32 1, %s10
  %s13 = scalar_select 0, %s12, %s10
  $region1: #{tpu_custom_call.1} parent=0
    #allocation2 [shape = 'u8[196608]{0}', space=vmem, size = 0x30000, scoped, tag = 'input window, operand 3, single buffered']
    #allocation3 [shape = 's32[2]{0}', space=sflag, size = 0x8, scoped, tag = 'scoped memory for tpu_custom_call.1']
    #allocation4 [shape = 's32[2]{0}', space=sflag, size = 0x8, scoped, tag = 'scoped memory for tpu_custom_call.1']
    #allocation5 [shape = 'u8[32768]{0}', space=vmem, size = 0x8000, scoped, tag = 'output window, operand 0']
    %14 = vsyncpa [#allocation3], 0
    %15 = vsyncpa [#allocation4], 0
    %s16 = scalar_lea.sflag [#allocation4], 1
    %17 = vsyncpa %s16, 0
    loop: start=0, step=1, limit=4
    $region2: #{tpu_custom_call.1} parent=1 // loop_pre_header
      _
    $region3: #{tpu_custom_call.1} parent=1 // loop_header
      %s19 = sphi 0, %s23
      %p20 = scmp.ge.s32.totalorder %s19, 4
      %s29 = sphi 0, %s31
      %s32 = sphi 0, %s29
      %s33 = sphi 0, %s32
      %s49 = sphi 0, %s33
      %s53 = sphi 0, %s53
      %s55 = sphi 0, %s53
      %s56 = sphi 0, %s55
      %s70 = sphi 0, %s56
      %s74 = sphi 0, %s74
      %s76 = sphi 0, %s74
      %s77 = sphi 0, %s76
      %s91 = sphi 0, %s77
      %s95 = sphi 0, %s95
      %s97 = sphi 0, %s95
      %s98 = sphi 0, %s97
      %s112 = sphi 0, %s98
      %s116 = sphi 0, %s116
      %s118 = sphi 0, %s116
      %s119 = sphi 0, %s118
      %s133 = sphi 0, %s119
      %s137 = sphi 0, %s137
      %s139 = sphi 0, %s137
      %s140 = sphi 0, %s139
      %s154 = sphi 0, %s140
      %s158 = sphi 0, %s158
      %s160 = sphi 0, %s158
      %s161 = sphi 0, %s160
      %s175 = sphi 0, %s161
      %s179 = sphi 0, %s179
      %s181 = sphi 0, %s179
      %s182 = sphi 0, %s181
      %s196 = sphi 0, %s182
      %s200 = sphi 0, %s200
      %s202 = sphi 0, %s200
      %s203 = sphi 0, %s202
      %s217 = sphi 0, %s203
      %s223 = sphi 0, %s225
      %s226 = sphi 0, %s223
      %s227 = sphi 0, %s226
      %s243 = sphi 0, %s227
    $region4: #{tpu_custom_call.1} parent=1 // loop_header_branch
      %22 = sbr.rel (%p20) target = $region8
    $region5: #{tpu_custom_call.1} parent=1 // loop_body
      %s24 = ssub.s32 %s19, 1
      %s25 = ssub.s32 %s19, 2
      %s26 = sadd.s32 %s19, 1
      %s27 = ssub.s32 %s19, %s26
      %p28 = scmp.eq.s32.totalorder %s27, 0
      %s30 = sadd.s32 %s29, 1
      %s31 = scalar_select %p28, %s29, %s30
      %p34 = pneg %p28
      %p35 = scmp.eq.s32.totalorder %s19, 1
      %p36 = por %p34, %p35
      %p37 = scmp.ne.s32.totalorder %s29, %s32
      %p38 = scmp.eq.s32.totalorder %s19, 0
      %p39 = por %p37, %p38
      %p40 = scmp.ne.s32.totalorder %s29, %s32
      %p41 = scmp.eq.s32.totalorder %s24, 1
      %p42 = por %p40, %p41
      %p43 = scmp.ne.s32.totalorder %s32, %s33
      %p44 = scmp.eq.s32.totalorder %s24, 0
      %p45 = por %p43, %p44
      %p46 = scmp.ne.s32.totalorder %s32, %s33
      %p47 = scmp.eq.s32.totalorder %s25, 1
      %p48 = por %p46, %p47
      %p50 = scmp.ne.s32.totalorder %s33, %s49
      %p51 = scmp.eq.s32.totalorder %s25, 0
      %p52 = por %p50, %p51
      %s54 = sadd.s32 %s53, 1
      %p57 = scmp.eq.s32.totalorder %s19, 1
      %p58 = scmp.ne.s32.totalorder %s53, %s55
      %p59 = scmp.eq.s32.totalorder %s19, 0
      %p60 = por %p58, %p59
      %p61 = scmp.ne.s32.totalorder %s53, %s55
      %p62 = scmp.eq.s32.totalorder %s24, 1
      %p63 = por %p61, %p62
      %p64 = scmp.ne.s32.totalorder %s55, %s56
      %p65 = scmp.eq.s32.totalorder %s24, 0
      %p66 = por %p64, %p65
      %p67 = scmp.ne.s32.totalorder %s55, %s56
      %p68 = scmp.eq.s32.totalorder %s25, 1
      %p69 = por %p67, %p68
      %p71 = scmp.ne.s32.totalorder %s56, %s70
      %p72 = scmp.eq.s32.totalorder %s25, 0
      %p73 = por %p71, %p72
      %s75 = sadd.s32 %s74, 1
      %p78 = scmp.eq.s32.totalorder %s19, 1
      %p79 = scmp.ne.s32.totalorder %s74, %s76
      %p80 = scmp.eq.s32.totalorder %s19, 0
      %p81 = por %p79, %p80
      %p82 = scmp.ne.s32.totalorder %s74, %s76
      %p83 = scmp.eq.s32.totalorder %s24, 1
      %p84 = por %p82, %p83
      %p85 = scmp.ne.s32.totalorder %s76, %s77
      %p86 = scmp.eq.s32.totalorder %s24, 0
      %p87 = por %p85, %p86
      %p88 = scmp.ne.s32.totalorder %s76, %s77
      %p89 = scmp.eq.s32.totalorder %s25, 1
      %p90 = por %p88, %p89
      %p92 = scmp.ne.s32.totalorder %s77, %s91
      %p93 = scmp.eq.s32.totalorder %s25, 0
      %p94 = por %p92, %p93
      %s96 = sadd.s32 %s95, 1
      %p99 = scmp.eq.s32.totalorder %s19, 1
      %p100 = scmp.ne.s32.totalorder %s95, %s97
      %p101 = scmp.eq.s32.totalorder %s19, 0
      %p102 = por %p100, %p101
      %p103 = scmp.ne.s32.totalorder %s95, %s97
      %p104 = scmp.eq.s32.totalorder %s24, 1
      %p105 = por %p103, %p104
      %p106 = scmp.ne.s32.totalorder %s97, %s98
      %p107 = scmp.eq.s32.totalorder %s24, 0
      %p108 = por %p106, %p107
      %p109 = scmp.ne.s32.totalorder %s97, %s98
      %p110 = scmp.eq.s32.totalorder %s25, 1
      %p111 = por %p109, %p110
      %p113 = scmp.ne.s32.totalorder %s98, %s112
      %p114 = scmp.eq.s32.totalorder %s25, 0
      %p115 = por %p113, %p114
      %s117 = sadd.s32 %s116, 1
      %p120 = scmp.eq.s32.totalorder %s19, 1
      %p121 = scmp.ne.s32.totalorder %s116, %s118
      %p122 = scmp.eq.s32.totalorder %s19, 0
      %p123 = por %p121, %p122
      %p124 = scmp.ne.s32.totalorder %s116, %s118
      %p125 = scmp.eq.s32.totalorder %s24, 1
      %p126 = por %p124, %p125
      %p127 = scmp.ne.s32.totalorder %s118, %s119
      %p128 = scmp.eq.s32.totalorder %s24, 0
      %p129 = por %p127, %p128
      %p130 = scmp.ne.s32.totalorder %s118, %s119
      %p131 = scmp.eq.s32.totalorder %s25, 1
      %p132 = por %p130, %p131
      %p134 = scmp.ne.s32.totalorder %s119, %s133
      %p135 = scmp.eq.s32.totalorder %s25, 0
      %p136 = por %p134, %p135
      %s138 = sadd.s32 %s137, 1
      %p141 = scmp.eq.s32.totalorder %s19, 1
      %p142 = scmp.ne.s32.totalorder %s137, %s139
      %p143 = scmp.eq.s32.totalorder %s19, 0
      %p144 = por %p142, %p143
      %p145 = scmp.ne.s32.totalorder %s137, %s139
      %p146 = scmp.eq.s32.totalorder %s24, 1
      %p147 = por %p145, %p146
      %p148 = scmp.ne.s32.totalorder %s139, %s140
      %p149 = scmp.eq.s32.totalorder %s24, 0
      %p150 = por %p148, %p149
      %p151 = scmp.ne.s32.totalorder %s139, %s140
      %p152 = scmp.eq.s32.totalorder %s25, 1
      %p153 = por %p151, %p152
      %p155 = scmp.ne.s32.totalorder %s140, %s154
      %p156 = scmp.eq.s32.totalorder %s25, 0
      %p157 = por %p155, %p156
      %s159 = sadd.s32 %s158, 1
      %p162 = scmp.eq.s32.totalorder %s19, 1
      %p163 = scmp.ne.s32.totalorder %s158, %s160
      %p164 = scmp.eq.s32.totalorder %s19, 0
      %p165 = por %p163, %p164
      %p166 = scmp.ne.s32.totalorder %s158, %s160
      %p167 = scmp.eq.s32.totalorder %s24, 1
      %p168 = por %p166, %p167
      %p169 = scmp.ne.s32.totalorder %s160, %s161
      %p170 = scmp.eq.s32.totalorder %s24, 0
      %p171 = por %p169, %p170
      %p172 = scmp.ne.s32.totalorder %s160, %s161
      %p173 = scmp.eq.s32.totalorder %s25, 1
      %p174 = por %p172, %p173
      %p176 = scmp.ne.s32.totalorder %s161, %s175
      %p177 = scmp.eq.s32.totalorder %s25, 0
      %p178 = por %p176, %p177
      %s180 = sadd.s32 %s179, 1
      %p183 = scmp.eq.s32.totalorder %s19, 1
      %p184 = scmp.ne.s32.totalorder %s179, %s181
      %p185 = scmp.eq.s32.totalorder %s19, 0
      %p186 = por %p184, %p185
      %p187 = scmp.ne.s32.totalorder %s179, %s181
      %p188 = scmp.eq.s32.totalorder %s24, 1
      %p189 = por %p187, %p188
      %p190 = scmp.ne.s32.totalorder %s181, %s182
      %p191 = scmp.eq.s32.totalorder %s24, 0
      %p192 = por %p190, %p191
      %p193 = scmp.ne.s32.totalorder %s181, %s182
      %p194 = scmp.eq.s32.totalorder %s25, 1
      %p195 = por %p193, %p194
      %p197 = scmp.ne.s32.totalorder %s182, %s196
      %p198 = scmp.eq.s32.totalorder %s25, 0
      %p199 = por %p197, %p198
      %s201 = sadd.s32 %s200, 1
      %p204 = scmp.eq.s32.totalorder %s19, 1
      %p205 = scmp.ne.s32.totalorder %s200, %s202
      %p206 = scmp.eq.s32.totalorder %s19, 0
      %p207 = por %p205, %p206
      %p208 = scmp.ne.s32.totalorder %s200, %s202
      %p209 = scmp.eq.s32.totalorder %s24, 1
      %p210 = por %p208, %p209
      %p211 = scmp.ne.s32.totalorder %s202, %s203
      %p212 = scmp.eq.s32.totalorder %s24, 0
      %p213 = por %p211, %p212
      %p214 = scmp.ne.s32.totalorder %s202, %s203
      %p215 = scmp.eq.s32.totalorder %s25, 1
      %p216 = por %p214, %p215
      %p218 = scmp.ne.s32.totalorder %s203, %s217
      %p219 = scmp.eq.s32.totalorder %s25, 0
      %p220 = por %p218, %p219
      %s221 = ssub.s32 %s19, %s26
      %p222 = scmp.eq.s32.totalorder %s221, 0
      %s224 = sadd.s32 %s223, 1
      %s225 = scalar_select %p222, %s223, %s224
      %p228 = pneg %p222
      %p229 = scmp.eq.s32.totalorder %s19, 1
      %p230 = por %p228, %p229
      %p231 = scmp.ne.s32.totalorder %s223, %s226
      %p232 = scmp.eq.s32.totalorder %s19, 0
      %p233 = por %p231, %p232
      %p234 = scmp.ne.s32.totalorder %s223, %s226
      %p235 = scmp.eq.s32.totalorder %s24, 1
      %p236 = por %p234, %p235
      %p237 = scmp.ne.s32.totalorder %s226, %s227
      %p238 = scmp.eq.s32.totalorder %s24, 0
      %p239 = por %p237, %p238
      %p240 = scmp.ne.s32.totalorder %s226, %s227
      %p241 = scmp.eq.s32.totalorder %s25, 1
      %p242 = por %p240, %p241
      %p244 = scmp.ne.s32.totalorder %s227, %s243
      %p245 = scmp.eq.s32.totalorder %s25, 0
      %p246 = por %p244, %p245
      %p247 = scmp.le.s32.totalorder 1, %s19
      %p248 = scmp.lt.s32.totalorder %s19, 3
      %p249 = pnand %p247, %p248
      %p250 = pneg %p249
      // Predicated region
      $region9: #{tpu_custom_call.1} parent=5 // pred_check
        _
      $region10: #{tpu_custom_call.1} parent=5 // pred_check_branch
        %252 = sbr.rel (%p249) target = $region12
      $region11: #{tpu_custom_call.1} parent=5 // pred_region
        %s253 = ssub.s32 %s19, 1
        // Predicated region
        $region13: #{tpu_custom_call.1} parent=11 // pred_check
          %p254 = pneg %p66
        $region14: #{tpu_custom_call.1} parent=11 // pred_check_branch
          %256 = sbr.rel (%p254) target = $region16
        $region15: #{tpu_custom_call.1} parent=11 // pred_region
          _
        $region16: #{tpu_custom_call.1} parent=11 // pred_fallthru
          _
        // Predicated region
        $region17: #{tpu_custom_call.1} parent=11 // pred_check
          %p257 = pneg %p87
        $region18: #{tpu_custom_call.1} parent=11 // pred_check_branch
          %259 = sbr.rel (%p257) target = $region20
        $region19: #{tpu_custom_call.1} parent=11 // pred_region
          _
        $region20: #{tpu_custom_call.1} parent=11 // pred_fallthru
          _
        // Predicated region
        $region21: #{tpu_custom_call.1} parent=11 // pred_check
          %p260 = pneg %p108
        $region22: #{tpu_custom_call.1} parent=11 // pred_check_branch
          %262 = sbr.rel (%p260) target = $region24
        $region23: #{tpu_custom_call.1} parent=11 // pred_region
          %s264 = ssub.s32 6144, 6144
          %265 = vsyncadd [#allocation3], %s264
          %s266 = sshll.u32 [#allocation2], 4
          %s267 = int_to_ptr.vmem [resolvable:$true] %s266
          %272 = dma.hbm_to_vmem [thread:$0]  %s3, 6144, %s267, [#allocation3], 128, 128, 8
        $region24: #{tpu_custom_call.1} parent=11 // pred_fallthru
          _
        // Predicated region
        $region25: #{tpu_custom_call.1} parent=11 // pred_check
          %p273 = pneg %p129
        $region26: #{tpu_custom_call.1} parent=11 // pred_check_branch
          %275 = sbr.rel (%p273) target = $region28
        $region27: #{tpu_custom_call.1} parent=11 // pred_region
          _
        $region28: #{tpu_custom_call.1} parent=11 // pred_fallthru
          _
        // Predicated region
        $region29: #{tpu_custom_call.1} parent=11 // pred_check
          %p276 = pneg %p150
        $region30: #{tpu_custom_call.1} parent=11 // pred_check_branch
          %278 = sbr.rel (%p276) target = $region32
        $region31: #{tpu_custom_call.1} parent=11 // pred_region
          _
        $region32: #{tpu_custom_call.1} parent=11 // pred_fallthru
          _
        // Predicated region
        $region33: #{tpu_custom_call.1} parent=11 // pred_check
          %p279 = pneg %p171
        $region34: #{tpu_custom_call.1} parent=11 // pred_check_branch
          %281 = sbr.rel (%p279) target = $region36
        $region35: #{tpu_custom_call.1} parent=11 // pred_region
          _
        $region36: #{tpu_custom_call.1} parent=11 // pred_fallthru
          _
        // Predicated region
        $region37: #{tpu_custom_call.1} parent=11 // pred_check
          %p282 = pneg %p192
        $region38: #{tpu_custom_call.1} parent=11 // pred_check_branch
          %284 = sbr.rel (%p282) target = $region40
        $region39: #{tpu_custom_call.1} parent=11 // pred_region
          _
        $region40: #{tpu_custom_call.1} parent=11 // pred_fallthru
          _
        // Predicated region
        $region41: #{tpu_custom_call.1} parent=11 // pred_check
          %p285 = pneg %p213
        $region42: #{tpu_custom_call.1} parent=11 // pred_check_branch
          %287 = sbr.rel (%p285) target = $region44
        $region43: #{tpu_custom_call.1} parent=11 // pred_region
          _
        $region44: #{tpu_custom_call.1} parent=11 // pred_fallthru
          _
      $region12: #{tpu_custom_call.1} parent=5 // pred_fallthru
        _
      %p288 = scmp.lt.s32.totalorder %s19, 2
      // Predicated region
      $region45: #{tpu_custom_call.1} parent=5 // pred_check
        %p289 = pneg %p288
      $region46: #{tpu_custom_call.1} parent=5 // pred_check_branch
        %291 = sbr.rel (%p289) target = $region48
      $region47: #{tpu_custom_call.1} parent=5 // pred_region
        // Predicated region
        $region49: #{tpu_custom_call.1} parent=47 // pred_check
          %p292 = pneg %p39
        $region50: #{tpu_custom_call.1} parent=47 // pred_check_branch
          %294 = sbr.rel (%p292) target = $region52
        $region51: #{tpu_custom_call.1} parent=47 // pred_region
          %s295 = smul.u32 4, %s19
          %p296 = scmp.lt.s32.totalorder %s295, 7
          %s297 = scalar_select %p296, %s295, 7
          %s298 = smul.addr %s297, 4
          %s299 = scalar_lea.vmem %s0, %s298
          %s300 = smul.u32 4, %s19
        $region52: #{tpu_custom_call.1} parent=47 // pred_fallthru
          _
      $region48: #{tpu_custom_call.1} parent=5 // pred_fallthru
        _
      %p301 = scmp.le.s32.totalorder 1, %s19
      %p302 = scmp.lt.s32.totalorder %s19, 3
      %p303 = pnand %p301, %p302
      %p304 = pneg %p303
      // Predicated region
      $region53: #{tpu_custom_call.1} parent=5 // pred_check
        _
      $region54: #{tpu_custom_call.1} parent=5 // pred_check_branch
        %306 = sbr.rel (%p303) target = $region56
      $region55: #{tpu_custom_call.1} parent=5 // pred_region
        %s307 = ssub.s32 %s19, 1
        // Predicated region
        $region57: #{tpu_custom_call.1} parent=55 // pred_check
          %p308 = pneg %p108
        $region58: #{tpu_custom_call.1} parent=55 // pred_check_branch
          %310 = sbr.rel (%p308) target = $region60
        $region59: #{tpu_custom_call.1} parent=55 // pred_region
          %311 = dma.done [#allocation3], 6144
        $region60: #{tpu_custom_call.1} parent=55 // pred_fallthru
          _
        %s312 = smul.u32 4, %s24
        %p313 = scmp.lt.s32.totalorder %s312, 7
        %s314 = scalar_select %p313, %s312, 7
        %s315 = smul.addr %s314, 4
        %s316 = scalar_lea.vmem %s0, %s315
        %p317 = pneg %p45
        %p318 = pneg %p42
        %p319 = pneg %p66
        %p320 = pneg %p63
        %p321 = pneg %p87
        %p322 = pneg %p84
        %p323 = pneg %p108
        %p324 = pneg %p105
        %p325 = pneg %p129
        %p326 = pneg %p126
        %p327 = pneg %p150
        %p328 = pneg %p147
        %p329 = pneg %p171
        %p330 = pneg %p168
        %p331 = pneg %p192
        %p332 = pneg %p189
        %p333 = pneg %p213
        %p334 = pneg %p210
        %p335 = pneg %p239
        %p336 = pneg %p236
        %s337 = sand.u32 %s226, 1
        %s338 = scalar_lea.sflag [#allocation4], %s337
        %s339 = sand.u32 %s226, 1
        %s340 = smul.addr %s339, 32
        %s341 = scalar_lea.vmem [#allocation5], %s340
        %s342 = smul.u32 4, %s24
        %p343 = scmp.lt.s32.totalorder %s342, 7
        %s344 = scalar_select %p343, %s342, 7
        %s345 = smul.addr %s344, 4
        %s346 = scalar_lea.vmem %s0, %s345
        %s347 = smul.u32 4, %s24
        %s348 = smul.u32 4, %s24
        %v350 = vld [vmem:[%s346] sm:$0xf]
        %v351 = vld [vmem:[%s346 + $0x4] sm:$0xf]
        %v352 = vld [vmem:[%s346 + $0x8] sm:$0xf]
        %v353 = vld [vmem:[%s346 + $0xc] sm:$0xf]
        %v354 = vld [vmem:[%s1] sm:$0xff]
        %v355 = vld [vmem:[%s1 + $0x8] sm:$0xf]
        %v356 = vld [vmem:[%s1 + $0xc] sm:$0xff]
        %v357 = vld [vmem:[%s1 + $0x14] sm:$0xf]
        %v358 = vld [vmem:[%s1 + $0x18] sm:$0xff]
        %v359 = vld [vmem:[%s1 + $0x20] sm:$0xf]
        %v360 = vld [vmem:[%s1 + $0x24] sm:$0xff]
        %v361 = vld [vmem:[%s1 + $0x2c] sm:$0xf]
        %v362 = vld [vmem:[%s2] sm:$0x7]
        %v364 = vlaneseq
        %v365 = vshrl.u32 %v364, 7
        %v366 = vsub.s32 0, %v365
        %v367 = vrot.slane %v362, %v366
        %v368 = vlaneseq
        %v369 = vshrl.u32 %v368, 7
        %v370 = vsub.s32 1, %v369
        %v371 = vrot.slane %v362, %v370
        %v372 = vlaneseq
        %v373 = vshrl.u32 %v372, 7
        %v374 = vsub.s32 2, %v373
        %v375 = vrot.slane %v362, %v374
        %v383 = vunpack.c.l.b16 %v350
        %v384 = vunpack.c.l.b16 %v351
        %v385 = vunpack.c.l.b16 %v352
        %v386 = vunpack.c.l.b16 %v353
        %v387 = vpack.c.b16 %v384, %v383
        %v388 = vpack.c.b16 %v386, %v385
        %v397 = vunpack.c.l.b16 %v354
        %v398 = vunpack.c.h.b16 %v354
        %v399 = vunpack.c.l.b16 %v355
        %v400 = vunpack.c.l.b16 %v356
        %v401 = vunpack.c.h.b16 %v356
        %v402 = vunpack.c.l.b16 %v357
        %v403 = vunpack.c.l.b16 %v358
        %v404 = vunpack.c.h.b16 %v358
        %v405 = vunpack.c.l.b16 %v359
        %v406 = vunpack.c.l.b16 %v360
        %v407 = vunpack.c.h.b16 %v360
        %v408 = vunpack.c.l.b16 %v361
        %v409 = vpack.c.b16 %v400, %v397
        %v410 = vpack.c.b16 %v401, %v398
        %v411 = vpack.c.b16 %v402, %v399
        %v412 = vpack.c.b16 %v406, %v403
        %v413 = vpack.c.b16 %v407, %v404
        %v414 = vpack.c.b16 %v408, %v405
        %vm421 = vcmask 261120
        %v423 = vsel %vm421, %v387, 0
        %v426 = vsel %vm421, %v388, 0
        %428 = vmatprep.subr.bf16.mxu0 %v410
        %429 = vmatpush1.bf16.msra.mxu0 %v409
        %430 = vmatprep.subr.bf16.mxu0 %v413
        %431 = vmatpush1.bf16.msra.mxu0 %v412
        %432 = vmatprep.subr.bf16.mxu0 0
        %433 = vmatpush1.bf16.msra.mxu0 0
        %434 = vmatprep.subr.bf16.mxu0 0
        %435 = vmatpush1.bf16.msra.mxu0 0
        %436 = vmatprep.subr.bf16.mxu0 0
        %437 = vmatpush1.bf16.msra.mxu0 0
        %438 = vmatprep.subr.bf16.mxu0 0
        %439 = vmatpush1.bf16.msra.mxu0 0
        %440 = vmatprep.subr.bf16.mxu0 0
        %441 = vmatpush1.bf16.msra.mxu0 0
        %442 = vmatprep.subr.bf16.mxu0 0
        %443 = vmatpush1.bf16.msra.mxu0 0
        %444 = vmatprep.subr.bf16.mxu0 0
        %445 = vmatpush1.bf16.msra.mxu0 0
        %446 = vmatprep.subr.bf16.mxu0 0
        %447 = vmatpush1.bf16.msra.mxu0 0
        %448 = vmatprep.subr.bf16.mxu0 0
        %449 = vmatpush1.bf16.msra.mxu0 0
        %450 = vmatprep.subr.bf16.mxu0 0
        %451 = vmatpush1.bf16.msra.mxu0 0
        %452 = vmatprep.subr.bf16.mxu0 0
        %453 = vmatpush1.bf16.msra.mxu0 0
        %454 = vmatprep.subr.bf16.mxu0 0
        %455 = vmatpush1.bf16.msra.mxu0 0
        %456 = vmatprep.subr.bf16.mxu0 0
        %457 = vmatpush1.bf16.msra.mxu0 0
        %458 = vmatprep.subr.bf16.mxu0 0
        %459 = vmatpush1.bf16.msra.mxu0 0
        %460 = vmatprep.mubr.bf16.mxu0 0
        %461 = vmatmul.mubr.bf16.gmra.mrb[0].mxu0 %v423
        %v462 = vpop.f32.mrb[0].mxu0
        %v463 = vadd.f32 %v367, %v462
        %v464 = vpop.f32.mrb[0].mxu0
        %v465 = vadd.f32 %v371, %v464
        %v466 = vpop.f32.mrb[0].mxu0
        %v467 = vadd.f32 %v367, %v466
        %v468 = vpop.f32.mrb[0].mxu0
        %v469 = vadd.f32 %v371, %v468
        %470 = vmatprep.mubr.bf16.mxu0 0
        %471 = vmatmul.mubr.bf16.gmra.mrb[0].mxu0 %v426
        %v472 = vpop.f32.mrb[0].mxu0
        %v473 = vadd.f32 %v367, %v472
        %v474 = vpop.f32.mrb[0].mxu0
        %v475 = vadd.f32 %v371, %v474
        %v476 = vpop.f32.mrb[0].mxu0
        %v477 = vadd.f32 %v367, %v476
        %v478 = vpop.f32.mrb[0].mxu0
        %v479 = vadd.f32 %v371, %v478
        %480 = vdwg.mxu0
        %481 = vmatprep.subr.bf16.mxu0 0
        %482 = vmatpush1.bf16.msra.mxu0 %v411
        %483 = vmatprep.subr.bf16.mxu0 0
        %484 = vmatpush1.bf16.msra.mxu0 %v414
        %485 = vmatprep.subr.bf16.mxu0 0
        %486 = vmatpush1.bf16.msra.mxu0 0
        %487 = vmatprep.subr.bf16.mxu0 0
        %488 = vmatpush1.bf16.msra.mxu0 0
        %489 = vmatprep.subr.bf16.mxu0 0
        %490 = vmatpush1.bf16.msra.mxu0 0
        %491 = vmatprep.subr.bf16.mxu0 0
        %492 = vmatpush1.bf16.msra.mxu0 0
        %493 = vmatprep.subr.bf16.mxu0 0
        %494 = vmatpush1.bf16.msra.mxu0 0
        %495 = vmatprep.subr.bf16.mxu0 0
        %496 = vmatpush1.bf16.msra.mxu0 0
        %497 = vmatprep.subr.bf16.mxu0 0
        %498 = vmatpush1.bf16.msra.mxu0 0
        %499 = vmatprep.subr.bf16.mxu0 0
        %500 = vmatpush1.bf16.msra.mxu0 0
        %501 = vmatprep.subr.bf16.mxu0 0
        %502 = vmatpush1.bf16.msra.mxu0 0
        %503 = vmatprep.subr.bf16.mxu0 0
        %504 = vmatpush1.bf16.msra.mxu0 0
        %505 = vmatprep.subr.bf16.mxu0 0
        %506 = vmatpush1.bf16.msra.mxu0 0
        %507 = vmatprep.subr.bf16.mxu0 0
        %508 = vmatpush1.bf16.msra.mxu0 0
        %509 = vmatprep.subr.bf16.mxu0 0
        %510 = vmatpush1.bf16.msra.mxu0 0
        %511 = vmatprep.subr.bf16.mxu0 0
        %512 = vmatpush1.bf16.msra.mxu0 0
        %513 = vmatprep.mubr.bf16.mxu0 0
        %514 = vmatmul.mubr.bf16.gmra.mrb[0].mxu0 %v423
        %v515 = vpop.f32.mrb[0].mxu0
        %v516 = vadd.f32 %v375, %v515
        %v517 = vpop.f32.mrb[0].mxu0
        %v518 = vpop.f32.mrb[0].mxu0
        %v519 = vadd.f32 %v375, %v518
        %v520 = vpop.f32.mrb[0].mxu0
        %521 = vmatprep.mubr.bf16.mxu0 0
        %522 = vmatmul.mubr.bf16.gmra.mrb[0].mxu0 %v426
        %v523 = vpop.f32.mrb[0].mxu0
        %v524 = vadd.f32 %v375, %v523
        %v525 = vpop.f32.mrb[0].mxu0
        %v526 = vpop.f32.mrb[0].mxu0
        %v527 = vadd.f32 %v375, %v526
        %v528 = vpop.f32.mrb[0].mxu0
        %529 = vdwg.mxu0
        %v530 = vmax.f32 %v463, 0.0
        %v531 = vmax.f32 %v465, 0.0
        %v532 = vmax.f32 %v516, 0.0
        %v533 = vmax.f32 %v467, 0.0
        %v534 = vmax.f32 %v469, 0.0
        %v535 = vmax.f32 %v519, 0.0
        %v536 = vmax.f32 %v473, 0.0
        %v537 = vmax.f32 %v475, 0.0
        %v538 = vmax.f32 %v524, 0.0
        %v539 = vmax.f32 %v477, 0.0
        %v540 = vmax.f32 %v479, 0.0
        %v541 = vmax.f32 %v527, 0.0
        %v542 = vpack.c.bf16 %v533, %v530
        %v543 = vpack.c.bf16 %v534, %v531
        %v544 = vpack.c.bf16 %v535, %v532
        %v545 = vpack.c.bf16 %v539, %v536
        %v546 = vpack.c.bf16 %v540, %v537
        %v547 = vpack.c.bf16 %v541, %v538
        %v548 = vld [vmem:[#allocation2] sm:$0xff]
        %v549 = vld [vmem:[#allocation2 + $0x8] sm:$0xff]
        %v550 = vld [vmem:[#allocation2 + $0x10] sm:$0xff]
        %v551 = vld [vmem:[#allocation2 + $0x18] sm:$0xff]
        %v552 = vld [vmem:[#allocation2 + $0x20] sm:$0xff]
        %v553 = vld [vmem:[#allocation2 + $0x28] sm:$0xff]
        %v554 = vld [vmem:[#allocation2 + $0x30] sm:$0xff]
        %v555 = vld [vmem:[#allocation2 + $0x38] sm:$0xff]
        %v556 = vld [vmem:[#allocation2 + $0x40] sm:$0xff]
        %v557 = vld [vmem:[#allocation2 + $0x48] sm:$0xff]
        %v558 = vld [vmem:[#allocation2 + $0x50] sm:$0xff]
        %v559 = vld [vmem:[#allocation2 + $0x58] sm:$0xff]
        %v560 = vld [vmem:[#allocation2 + $0x60] sm:$0xff]
        %v561 = vld [vmem:[#allocation2 + $0x68] sm:$0xff]
        %v562 = vld [vmem:[#allocation2 + $0x70] sm:$0xff]
        %v563 = vld [vmem:[#allocation2 + $0x78] sm:$0xff]
        %v564 = vld [vmem:[#allocation2 + $0x80] sm:$0xff]
        %v565 = vld [vmem:[#allocation2 + $0x88] sm:$0xff]
        %v566 = vld [vmem:[#allocation2 + $0x90] sm:$0xff]
        %v567 = vld [vmem:[#allocation2 + $0x98] sm:$0xff]
        %v568 = vld [vmem:[#allocation2 + $0xa0] sm:$0xff]
        %v569 = vld [vmem:[#allocation2 + $0xa8] sm:$0xff]
        %v570 = vld [vmem:[#allocation2 + $0xb0] sm:$0xff]
        %v571 = vld [vmem:[#allocation2 + $0xb8] sm:$0xff]
        %v572 = vld [vmem:[#allocation2 + $0xc0] sm:$0xff]
        %v573 = vld [vmem:[#allocation2 + $0xc8] sm:$0xff]
        %v574 = vld [vmem:[#allocation2 + $0xd0] sm:$0xff]
        %v575 = vld [vmem:[#allocation2 + $0xd8] sm:$0xff]
        %v576 = vld [vmem:[#allocation2 + $0xe0] sm:$0xff]
        %v577 = vld [vmem:[#allocation2 + $0xe8] sm:$0xff]
        %v578 = vld [vmem:[#allocation2 + $0xf0] sm:$0xff]
        %v579 = vld [vmem:[#allocation2 + $0xf8] sm:$0xff]
        %v580 = vld [vmem:[#allocation2 + $0x100] sm:$0xff]
        %v581 = vld [vmem:[#allocation2 + $0x108] sm:$0xff]
        %v582 = vld [vmem:[#allocation2 + $0x110] sm:$0xff]
        %v583 = vld [vmem:[#allocation2 + $0x118] sm:$0xff]
        %v584 = vld [vmem:[#allocation2 + $0x120] sm:$0xff]
        %v585 = vld [vmem:[#allocation2 + $0x128] sm:$0xff]
        %v586 = vld [vmem:[#allocation2 + $0x130] sm:$0xff]
        %v587 = vld [vmem:[#allocation2 + $0x138] sm:$0xff]
        %v588 = vld [vmem:[#allocation2 + $0x140] sm:$0xff]
        %v589 = vld [vmem:[#allocation2 + $0x148] sm:$0xff]
        %v590 = vld [vmem:[#allocation2 + $0x150] sm:$0xff]
        %v591 = vld [vmem:[#allocation2 + $0x158] sm:$0xff]
        %v592 = vld [vmem:[#allocation2 + $0x160] sm:$0xff]
        %v593 = vld [vmem:[#allocation2 + $0x168] sm:$0xff]
        %v594 = vld [vmem:[#allocation2 + $0x170] sm:$0xff]
        %v595 = vld [vmem:[#allocation2 + $0x178] sm:$0xff]
        %v596 = vld [vmem:[%s4] sm:$0x3]
        %v598 = vlaneseq
        %v599 = vshrl.u32 %v598, 7
        %v600 = vsub.s32 0, %v599
        %v601 = vrot.slane %v596, %v600
        %v602 = vlaneseq
        %v603 = vshrl.u32 %v602, 7
        %v604 = vsub.s32 1, %v603
        %v605 = vrot.slane %v596, %v604
        %v656 = vunpack.c.l.b16 %v548
        %v657 = vunpack.c.h.b16 %v548
        %v658 = vunpack.c.l.b16 %v549
        %v659 = vunpack.c.h.b16 %v549
        %v660 = vunpack.c.l.b16 %v550
        %v661 = vunpack.c.h.b16 %v550
        %v662 = vunpack.c.l.b16 %v551
        %v663 = vunpack.c.h.b16 %v551
        %v664 = vunpack.c.l.b16 %v552
        %v665 = vunpack.c.h.b16 %v552
        %v666 = vunpack.c.l.b16 %v553
        %v667 = vunpack.c.h.b16 %v553
        %v668 = vunpack.c.l.b16 %v554
        %v669 = vunpack.c.h.b16 %v554
        %v670 = vunpack.c.l.b16 %v555
        %v671 = vunpack.c.h.b16 %v555
        %v672 = vunpack.c.l.b16 %v556
        %v673 = vunpack.c.h.b16 %v556
        %v674 = vunpack.c.l.b16 %v557
        %v675 = vunpack.c.h.b16 %v557
        %v676 = vunpack.c.l.b16 %v558
        %v677 = vunpack.c.h.b16 %v558
        %v678 = vunpack.c.l.b16 %v559
        %v679 = vunpack.c.h.b16 %v559
        %v680 = vunpack.c.l.b16 %v560
        %v681 = vunpack.c.h.b16 %v560
        %v682 = vunpack.c.l.b16 %v561
        %v683 = vunpack.c.h.b16 %v561
        %v684 = vunpack.c.l.b16 %v562
        %v685 = vunpack.c.h.b16 %v562
        %v686 = vunpack.c.l.b16 %v563
        %v687 = vunpack.c.h.b16 %v563
        %v688 = vunpack.c.l.b16 %v564
        %v689 = vunpack.c.h.b16 %v564
        %v690 = vunpack.c.l.b16 %v565
        %v691 = vunpack.c.h.b16 %v565
        %v692 = vunpack.c.l.b16 %v566
        %v693 = vunpack.c.h.b16 %v566
        %v694 = vunpack.c.l.b16 %v567
        %v695 = vunpack.c.h.b16 %v567
        %v696 = vunpack.c.l.b16 %v568
        %v697 = vunpack.c.h.b16 %v568
        %v698 = vunpack.c.l.b16 %v569
        %v699 = vunpack.c.h.b16 %v569
        %v700 = vunpack.c.l.b16 %v570
        %v701 = vunpack.c.h.b16 %v570
        %v702 = vunpack.c.l.b16 %v571
        %v703 = vunpack.c.h.b16 %v571
        %v704 = vunpack.c.l.b16 %v572
        %v705 = vunpack.c.h.b16 %v572
        %v706 = vunpack.c.l.b16 %v573
        %v707 = vunpack.c.h.b16 %v573
        %v708 = vunpack.c.l.b16 %v574
        %v709 = vunpack.c.h.b16 %v574
        %v710 = vunpack.c.l.b16 %v575
        %v711 = vunpack.c.h.b16 %v575
        %v712 = vunpack.c.l.b16 %v576
        %v713 = vunpack.c.h.b16 %v576
        %v714 = vunpack.c.l.b16 %v577
        %v715 = vunpack.c.h.b16 %v577
        %v716 = vunpack.c.l.b16 %v578
        %v717 = vunpack.c.h.b16 %v578
        %v718 = vunpack.c.l.b16 %v579
        %v719 = vunpack.c.h.b16 %v579
        %v720 = vunpack.c.l.b16 %v580
        %v721 = vunpack.c.h.b16 %v580
        %v722 = vunpack.c.l.b16 %v581
        %v723 = vunpack.c.h.b16 %v581
        %v724 = vunpack.c.l.b16 %v582
        %v725 = vunpack.c.h.b16 %v582
        %v726 = vunpack.c.l.b16 %v583
        %v727 = vunpack.c.h.b16 %v583
        %v728 = vunpack.c.l.b16 %v584
        %v729 = vunpack.c.h.b16 %v584
        %v730 = vunpack.c.l.b16 %v585
        %v731 = vunpack.c.h.b16 %v585
        %v732 = vunpack.c.l.b16 %v586
        %v733 = vunpack.c.h.b16 %v586
        %v734 = vunpack.c.l.b16 %v587
        %v735 = vunpack.c.h.b16 %v587
        %v736 = vunpack.c.l.b16 %v588
        %v737 = vunpack.c.h.b16 %v588
        %v738 = vunpack.c.l.b16 %v589
        %v739 = vunpack.c.h.b16 %v589
        %v740 = vunpack.c.l.b16 %v590
        %v741 = vunpack.c.h.b16 %v590
        %v742 = vunpack.c.l.b16 %v591
        %v743 = vunpack.c.h.b16 %v591
        %v744 = vunpack.c.l.b16 %v592
        %v745 = vunpack.c.h.b16 %v592
        %v746 = vunpack.c.l.b16 %v593
        %v747 = vunpack.c.h.b16 %v593
        %v748 = vunpack.c.l.b16 %v594
        %v749 = vunpack.c.h.b16 %v594
        %v750 = vunpack.c.l.b16 %v595
        %v751 = vunpack.c.h.b16 %v595
        %v752 = vpack.c.b16 %v658, %v656
        %v753 = vpack.c.b16 %v659, %v657
        %v754 = vpack.c.b16 %v662, %v660
        %v755 = vpack.c.b16 %v663, %v661
        %v756 = vpack.c.b16 %v666, %v664
        %v757 = vpack.c.b16 %v667, %v665
        %v758 = vpack.c.b16 %v670, %v668
        %v759 = vpack.c.b16 %v671, %v669
        %v760 = vpack.c.b16 %v674, %v672
        %v761 = vpack.c.b16 %v675, %v673
        %v762 = vpack.c.b16 %v678, %v676
        %v763 = vpack.c.b16 %v679, %v677
        %v764 = vpack.c.b16 %v682, %v680
        %v765 = vpack.c.b16 %v683, %v681
        %v766 = vpack.c.b16 %v686, %v684
        %v767 = vpack.c.b16 %v687, %v685
        %v768 = vpack.c.b16 %v690, %v688
        %v769 = vpack.c.b16 %v691, %v689
        %v770 = vpack.c.b16 %v694, %v692
        %v771 = vpack.c.b16 %v695, %v693
        %v772 = vpack.c.b16 %v698, %v696
        %v773 = vpack.c.b16 %v699, %v697
        %v774 = vpack.c.b16 %v702, %v700
        %v775 = vpack.c.b16 %v703, %v701
        %v776 = vpack.c.b16 %v706, %v704
        %v777 = vpack.c.b16 %v707, %v705
        %v778 = vpack.c.b16 %v710, %v708
        %v779 = vpack.c.b16 %v711, %v709
        %v780 = vpack.c.b16 %v714, %v712
        %v781 = vpack.c.b16 %v715, %v713
        %v782 = vpack.c.b16 %v718, %v716
        %v783 = vpack.c.b16 %v719, %v717
        %v784 = vpack.c.b16 %v722, %v720
        %v785 = vpack.c.b16 %v723, %v721
        %v786 = vpack.c.b16 %v726, %v724
        %v787 = vpack.c.b16 %v727, %v725
        %v788 = vpack.c.b16 %v730, %v728
        %v789 = vpack.c.b16 %v731, %v729
        %v790 = vpack.c.b16 %v734, %v732
        %v791 = vpack.c.b16 %v735, %v733
        %v792 = vpack.c.b16 %v738, %v736
        %v793 = vpack.c.b16 %v739, %v737
        %v794 = vpack.c.b16 %v742, %v740
        %v795 = vpack.c.b16 %v743, %v741
        %v796 = vpack.c.b16 %v746, %v744
        %v797 = vpack.c.b16 %v747, %v745
        %v798 = vpack.c.b16 %v750, %v748
        %v799 = vpack.c.b16 %v751, %v749
        %848 = vmatprep.subr.bf16.mxu0 %v753
        %849 = vmatpush1.bf16.msra.mxu0 %v752
        %850 = vmatprep.subr.bf16.mxu0 %v755
        %851 = vmatpush1.bf16.msra.mxu0 %v754
        %852 = vmatprep.subr.bf16.mxu0 %v757
        %853 = vmatpush1.bf16.msra.mxu0 %v756
        %854 = vmatprep.subr.bf16.mxu0 %v759
        %855 = vmatpush1.bf16.msra.mxu0 %v758
        %856 = vmatprep.subr.bf16.mxu0 %v761
        %857 = vmatpush1.bf16.msra.mxu0 %v760
        %858 = vmatprep.subr.bf16.mxu0 %v763
        %859 = vmatpush1.bf16.msra.mxu0 %v762
        %860 = vmatprep.subr.bf16.mxu0 %v765
        %861 = vmatpush1.bf16.msra.mxu0 %v764
        %862 = vmatprep.subr.bf16.mxu0 %v767
        %863 = vmatpush1.bf16.msra.mxu0 %v766
        %864 = vmatprep.subr.bf16.mxu0 %v769
        %865 = vmatpush1.bf16.msra.mxu0 %v768
        %866 = vmatprep.subr.bf16.mxu0 %v771
        %867 = vmatpush1.bf16.msra.mxu0 %v770
        %868 = vmatprep.subr.bf16.mxu0 %v773
        %869 = vmatpush1.bf16.msra.mxu0 %v772
        %870 = vmatprep.subr.bf16.mxu0 %v775
        %871 = vmatpush1.bf16.msra.mxu0 %v774
        %872 = vmatprep.subr.bf16.mxu0 %v777
        %873 = vmatpush1.bf16.msra.mxu0 %v776
        %874 = vmatprep.subr.bf16.mxu0 %v779
        %875 = vmatpush1.bf16.msra.mxu0 %v778
        %876 = vmatprep.subr.bf16.mxu0 %v781
        %877 = vmatpush1.bf16.msra.mxu0 %v780
        %878 = vmatprep.subr.bf16.mxu0 %v783
        %879 = vmatpush1.bf16.msra.mxu0 %v782
        %880 = vmatprep.mubr.bf16.mxu0 %v543
        %881 = vmatmul.mubr.bf16.gmra.mrb[0].mxu0 %v542
        %v882 = vpop.f32.mrb[0].mxu0
        %v883 = vadd.f32 %v601, %v882
        %v884 = vpop.f32.mrb[0].mxu0
        %v885 = vadd.f32 %v605, %v884
        %v886 = vpop.f32.mrb[0].mxu0
        %v887 = vadd.f32 %v601, %v886
        %v888 = vpop.f32.mrb[0].mxu0
        %v889 = vadd.f32 %v605, %v888
        %890 = vmatprep.mubr.bf16.mxu0 %v546
        %891 = vmatmul.mubr.bf16.gmra.mrb[0].mxu0 %v545
        %v892 = vpop.f32.mrb[0].mxu0
        %v893 = vadd.f32 %v601, %v892
        %v894 = vpop.f32.mrb[0].mxu0
        %v895 = vadd.f32 %v605, %v894
        %v896 = vpop.f32.mrb[0].mxu0
        %v897 = vadd.f32 %v601, %v896
        %v898 = vpop.f32.mrb[0].mxu0
        %v899 = vadd.f32 %v605, %v898
        %900 = vdwg.mxu0
        %901 = vmatprep.subr.bf16.mxu0 %v785
        %902 = vmatpush1.bf16.msra.mxu0 %v784
        %903 = vmatprep.subr.bf16.mxu0 %v787
        %904 = vmatpush1.bf16.msra.mxu0 %v786
        %905 = vmatprep.subr.bf16.mxu0 %v789
        %906 = vmatpush1.bf16.msra.mxu0 %v788
        %907 = vmatprep.subr.bf16.mxu0 %v791
        %908 = vmatpush1.bf16.msra.mxu0 %v790
        %909 = vmatprep.subr.bf16.mxu0 %v793
        %910 = vmatpush1.bf16.msra.mxu0 %v792
        %911 = vmatprep.subr.bf16.mxu0 %v795
        %912 = vmatpush1.bf16.msra.mxu0 %v794
        %913 = vmatprep.subr.bf16.mxu0 %v797
        %914 = vmatpush1.bf16.msra.mxu0 %v796
        %915 = vmatprep.subr.bf16.mxu0 %v799
        %916 = vmatpush1.bf16.msra.mxu0 %v798
        %917 = vmatprep.subr.bf16.mxu0 0
        %918 = vmatpush1.bf16.msra.mxu0 0
        %919 = vmatprep.subr.bf16.mxu0 0
        %920 = vmatpush1.bf16.msra.mxu0 0
        %921 = vmatprep.subr.bf16.mxu0 0
        %922 = vmatpush1.bf16.msra.mxu0 0
        %923 = vmatprep.subr.bf16.mxu0 0
        %924 = vmatpush1.bf16.msra.mxu0 0
        %925 = vmatprep.subr.bf16.mxu0 0
        %926 = vmatpush1.bf16.msra.mxu0 0
        %927 = vmatprep.subr.bf16.mxu0 0
        %928 = vmatpush1.bf16.msra.mxu0 0
        %929 = vmatprep.subr.bf16.mxu0 0
        %930 = vmatpush1.bf16.msra.mxu0 0
        %931 = vmatprep.subr.bf16.mxu0 0
        %932 = vmatpush1.bf16.msra.mxu0 0
        %933 = vmatprep.mubr.bf16.mxu0 0
        %934 = vmatmul.mubr.bf16.gmra.mrb[0].mxu0 %v544
        %v935 = vpop.f32.mrb[0].mxu0
        %v936 = vadd.f32 %v883, %v935
        %v937 = vpop.f32.mrb[0].mxu0
        %v938 = vadd.f32 %v885, %v937
        %v939 = vpop.f32.mrb[0].mxu0
        %v940 = vadd.f32 %v887, %v939
        %v941 = vpop.f32.mrb[0].mxu0
        %v942 = vadd.f32 %v889, %v941
        %943 = vmatprep.mubr.bf16.mxu0 0
        %944 = vmatmul.mubr.bf16.gmra.mrb[0].mxu0 %v547
        %v945 = vpop.f32.mrb[0].mxu0
        %v946 = vadd.f32 %v893, %v945
        %v947 = vpop.f32.mrb[0].mxu0
        %v948 = vadd.f32 %v895, %v947
        %v949 = vpop.f32.mrb[0].mxu0
        %v950 = vadd.f32 %v897, %v949
        %v951 = vpop.f32.mrb[0].mxu0
        %v952 = vadd.f32 %v899, %v951
        %953 = vdwg.mxu0
        %v954 = vmax.f32 %v936, 0.0
        %v955 = vmax.f32 %v938, 0.0
        %v956 = vmax.f32 %v940, 0.0
        %v957 = vmax.f32 %v942, 0.0
        %v958 = vmax.f32 %v946, 0.0
        %v959 = vmax.f32 %v948, 0.0
        %v960 = vmax.f32 %v950, 0.0
        %v961 = vmax.f32 %v952, 0.0
        %v962 = vpack.c.bf16 %v956, %v954
        %v963 = vpack.c.bf16 %v957, %v955
        %v964 = vpack.c.bf16 %v960, %v958
        %v965 = vpack.c.bf16 %v961, %v959
        %v966 = vld [vmem:[%s5] sm:$0xf]
        %v967 = vld [vmem:[%s5 + $0x4] sm:$0xf]
        %v968 = vld [vmem:[%s5 + $0x8] sm:$0xf]
        %v969 = vld [vmem:[%s5 + $0xc] sm:$0xf]
        %v970 = vld [vmem:[%s5 + $0x10] sm:$0xf]
        %v971 = vld [vmem:[%s5 + $0x14] sm:$0xf]
        %v972 = vld [vmem:[%s5 + $0x18] sm:$0xf]
        %v973 = vld [vmem:[%s5 + $0x1c] sm:$0xf]
        %v974 = vld [vmem:[%s5 + $0x20] sm:$0xf]
        %v975 = vld [vmem:[%s5 + $0x24] sm:$0xf]
        %v976 = vld [vmem:[%s5 + $0x28] sm:$0xf]
        %v977 = vld [vmem:[%s5 + $0x2c] sm:$0xf]
        %v978 = vld [vmem:[%s5 + $0x30] sm:$0xf]
        %v979 = vld [vmem:[%s5 + $0x34] sm:$0xf]
        %v980 = vld [vmem:[%s5 + $0x38] sm:$0xf]
        %v981 = vld [vmem:[%s5 + $0x3c] sm:$0xf]
        %v982 = vld [vmem:[%s5 + $0x40] sm:$0xf]
        %v983 = vld [vmem:[%s5 + $0x44] sm:$0xf]
        %v984 = vld [vmem:[%s5 + $0x48] sm:$0xf]
        %v985 = vld [vmem:[%s5 + $0x4c] sm:$0xf]
        %v986 = vld [vmem:[%s5 + $0x50] sm:$0xf]
        %v987 = vld [vmem:[%s5 + $0x54] sm:$0xf]
        %v988 = vld [vmem:[%s5 + $0x58] sm:$0xf]
        %v989 = vld [vmem:[%s5 + $0x5c] sm:$0xf]
        %v990 = vld [vmem:[%s5 + $0x60] sm:$0xf]
        %v991 = vld [vmem:[%s5 + $0x64] sm:$0xf]
        %v992 = vld [vmem:[%s5 + $0x68] sm:$0xf]
        %v993 = vld [vmem:[%s5 + $0x6c] sm:$0xf]
        %v994 = vld [vmem:[%s5 + $0x70] sm:$0xf]
        %v995 = vld [vmem:[%s5 + $0x74] sm:$0xf]
        %v996 = vld [vmem:[%s5 + $0x78] sm:$0xf]
        %v997 = vld [vmem:[%s5 + $0x7c] sm:$0xf]
        %v998 = vld [vmem:[%s6] sm:$0x1]
        %v1000 = vlaneseq
        %v1001 = vshrl.u32 %v1000, 7
        %v1002 = vsub.s32 0, %v1001
        %v1003 = vrot.slane %v998, %v1002
        %v1037 = vunpack.c.l.b16 %v966
        %v1038 = vunpack.c.l.b16 %v967
        %v1039 = vunpack.c.l.b16 %v968
        %v1040 = vunpack.c.l.b16 %v969
        %v1041 = vunpack.c.l.b16 %v970
        %v1042 = vunpack.c.l.b16 %v971
        %v1043 = vunpack.c.l.b16 %v972
        %v1044 = vunpack.c.l.b16 %v973
        %v1045 = vunpack.c.l.b16 %v974
        %v1046 = vunpack.c.l.b16 %v975
        %v1047 = vunpack.c.l.b16 %v976
        %v1048 = vunpack.c.l.b16 %v977
        %v1049 = vunpack.c.l.b16 %v978
        %v1050 = vunpack.c.l.b16 %v979
        %v1051 = vunpack.c.l.b16 %v980
        %v1052 = vunpack.c.l.b16 %v981
        %v1053 = vunpack.c.l.b16 %v982
        %v1054 = vunpack.c.l.b16 %v983
        %v1055 = vunpack.c.l.b16 %v984
        %v1056 = vunpack.c.l.b16 %v985
        %v1057 = vunpack.c.l.b16 %v986
        %v1058 = vunpack.c.l.b16 %v987
        %v1059 = vunpack.c.l.b16 %v988
        %v1060 = vunpack.c.l.b16 %v989
        %v1061 = vunpack.c.l.b16 %v990
        %v1062 = vunpack.c.l.b16 %v991
        %v1063 = vunpack.c.l.b16 %v992
        %v1064 = vunpack.c.l.b16 %v993
        %v1065 = vunpack.c.l.b16 %v994
        %v1066 = vunpack.c.l.b16 %v995
        %v1067 = vunpack.c.l.b16 %v996
        %v1068 = vunpack.c.l.b16 %v997
        %v1069 = vpack.c.b16 %v1038, %v1037
        %v1070 = vpack.c.b16 %v1040, %v1039
        %v1071 = vpack.c.b16 %v1042, %v1041
        %v1072 = vpack.c.b16 %v1044, %v1043
        %v1073 = vpack.c.b16 %v1046, %v1045
        %v1074 = vpack.c.b16 %v1048, %v1047
        %v1075 = vpack.c.b16 %v1050, %v1049
        %v1076 = vpack.c.b16 %v1052, %v1051
        %v1077 = vpack.c.b16 %v1054, %v1053
        %v1078 = vpack.c.b16 %v1056, %v1055
        %v1079 = vpack.c.b16 %v1058, %v1057
        %v1080 = vpack.c.b16 %v1060, %v1059
        %v1081 = vpack.c.b16 %v1062, %v1061
        %v1082 = vpack.c.b16 %v1064, %v1063
        %v1083 = vpack.c.b16 %v1066, %v1065
        %v1084 = vpack.c.b16 %v1068, %v1067
        %1101 = vmatprep.subr.bf16.mxu0 0
        %1102 = vmatpush1.bf16.msra.mxu0 %v1069
        %1103 = vmatprep.subr.bf16.mxu0 0
        %1104 = vmatpush1.bf16.msra.mxu0 %v1070
        %1105 = vmatprep.subr.bf16.mxu0 0
        %1106 = vmatpush1.bf16.msra.mxu0 %v1071
        %1107 = vmatprep.subr.bf16.mxu0 0
        %1108 = vmatpush1.bf16.msra.mxu0 %v1072
        %1109 = vmatprep.subr.bf16.mxu0 0
        %1110 = vmatpush1.bf16.msra.mxu0 %v1073
        %1111 = vmatprep.subr.bf16.mxu0 0
        %1112 = vmatpush1.bf16.msra.mxu0 %v1074
        %1113 = vmatprep.subr.bf16.mxu0 0
        %1114 = vmatpush1.bf16.msra.mxu0 %v1075
        %1115 = vmatprep.subr.bf16.mxu0 0
        %1116 = vmatpush1.bf16.msra.mxu0 %v1076
        %1117 = vmatprep.subr.bf16.mxu0 0
        %1118 = vmatpush1.bf16.msra.mxu0 %v1077
        %1119 = vmatprep.subr.bf16.mxu0 0
        %1120 = vmatpush1.bf16.msra.mxu0 %v1078
        %1121 = vmatprep.subr.bf16.mxu0 0
        %1122 = vmatpush1.bf16.msra.mxu0 %v1079
        %1123 = vmatprep.subr.bf16.mxu0 0
        %1124 = vmatpush1.bf16.msra.mxu0 %v1080
        %1125 = vmatprep.subr.bf16.mxu0 0
        %1126 = vmatpush1.bf16.msra.mxu0 %v1081
        %1127 = vmatprep.subr.bf16.mxu0 0
        %1128 = vmatpush1.bf16.msra.mxu0 %v1082
        %1129 = vmatprep.subr.bf16.mxu0 0
        %1130 = vmatpush1.bf16.msra.mxu0 %v1083
        %1131 = vmatprep.subr.bf16.mxu0 0
        %1132 = vmatpush1.bf16.msra.mxu0 %v1084
        %1133 = vmatprep.mubr.bf16.mxu0 %v963
        %1134 = vmatmul.mubr.bf16.gmra.mrb[0].mxu0 %v962
        %v1135 = vpop.f32.mrb[0].mxu0
        %v1136 = vadd.f32 %v1003, %v1135
        %v1137 = vpop.f32.mrb[0].mxu0
        %v1138 = vpop.f32.mrb[0].mxu0
        %v1139 = vadd.f32 %v1003, %v1138
        %v1140 = vpop.f32.mrb[0].mxu0
        %1141 = vmatprep.mubr.bf16.mxu0 %v965
        %1142 = vmatmul.mubr.bf16.gmra.mrb[0].mxu0 %v964
        %v1143 = vpop.f32.mrb[0].mxu0
        %v1144 = vadd.f32 %v1003, %v1143
        %v1145 = vpop.f32.mrb[0].mxu0
        %v1146 = vpop.f32.mrb[0].mxu0
        %v1147 = vadd.f32 %v1003, %v1146
        %v1148 = vpop.f32.mrb[0].mxu0
        %1149 = vdwg.mxu0
        %v1150 = vmax.f32 %v1136, 0.0
        %v1151 = vmax.f32 %v1139, 0.0
        %v1152 = vmax.f32 %v1144, 0.0
        %v1153 = vmax.f32 %v1147, 0.0
        %v1154 = vpack.c.bf16 %v1151, %v1150
        %v1155 = vpack.c.bf16 %v1153, %v1152
        %v1156 = vld [vmem:[%s7] sm:$0xf]
        %v1157 = vld [vmem:[%s7 + $0x4] sm:$0xf]
        %v1158 = vld [vmem:[%s7 + $0x8] sm:$0xf]
        %v1159 = vld [vmem:[%s7 + $0xc] sm:$0xf]
        %v1160 = vld [vmem:[%s7 + $0x10] sm:$0xf]
        %v1161 = vld [vmem:[%s7 + $0x14] sm:$0xf]
        %v1162 = vld [vmem:[%s7 + $0x18] sm:$0xf]
        %v1163 = vld [vmem:[%s7 + $0x1c] sm:$0xf]
        %v1164 = vld [vmem:[%s8] sm:$0x1]
        %v1166 = vlaneseq
        %v1167 = vshrl.u32 %v1166, 7
        %v1168 = vsub.s32 0, %v1167
        %v1169 = vrot.slane %v1164, %v1168
        %v1179 = vunpack.c.l.b16 %v1156
        %v1180 = vunpack.c.l.b16 %v1157
        %v1181 = vunpack.c.l.b16 %v1158
        %v1182 = vunpack.c.l.b16 %v1159
        %v1183 = vunpack.c.l.b16 %v1160
        %v1184 = vunpack.c.l.b16 %v1161
        %v1185 = vunpack.c.l.b16 %v1162
        %v1186 = vunpack.c.l.b16 %v1163
        %v1187 = vpack.c.b16 %v1180, %v1179
        %v1188 = vpack.c.b16 %v1182, %v1181
        %v1189 = vpack.c.b16 %v1184, %v1183
        %v1190 = vpack.c.b16 %v1186, %v1185
        %vm1195 = vcmask 523264
        %v1197 = vsel %vm1195, %v1154, 0
        %v1200 = vsel %vm1195, %v1155, 0
        %1202 = vmatprep.subr.bf16.mxu0 0
        %1203 = vmatpush1.bf16.msra.mxu0 %v1187
        %1204 = vmatprep.subr.bf16.mxu0 0
        %1205 = vmatpush1.bf16.msra.mxu0 %v1188
        %1206 = vmatprep.subr.bf16.mxu0 0
        %1207 = vmatpush1.bf16.msra.mxu0 %v1189
        %1208 = vmatprep.subr.bf16.mxu0 0
        %1209 = vmatpush1.bf16.msra.mxu0 %v1190
        %1210 = vmatprep.subr.bf16.mxu0 0
        %1211 = vmatpush1.bf16.msra.mxu0 0
        %1212 = vmatprep.subr.bf16.mxu0 0
        %1213 = vmatpush1.bf16.msra.mxu0 0
        %1214 = vmatprep.subr.bf16.mxu0 0
        %1215 = vmatpush1.bf16.msra.mxu0 0
        %1216 = vmatprep.subr.bf16.mxu0 0
        %1217 = vmatpush1.bf16.msra.mxu0 0
        %1218 = vmatprep.subr.bf16.mxu0 0
        %1219 = vmatpush1.bf16.msra.mxu0 0
        %1220 = vmatprep.subr.bf16.mxu0 0
        %1221 = vmatpush1.bf16.msra.mxu0 0
        %1222 = vmatprep.subr.bf16.mxu0 0
        %1223 = vmatpush1.bf16.msra.mxu0 0
        %1224 = vmatprep.subr.bf16.mxu0 0
        %1225 = vmatpush1.bf16.msra.mxu0 0
        %1226 = vmatprep.subr.bf16.mxu0 0
        %1227 = vmatpush1.bf16.msra.mxu0 0
        %1228 = vmatprep.subr.bf16.mxu0 0
        %1229 = vmatpush1.bf16.msra.mxu0 0
        %1230 = vmatprep.subr.bf16.mxu0 0
        %1231 = vmatpush1.bf16.msra.mxu0 0
        %1232 = vmatprep.subr.bf16.mxu0 0
        %1233 = vmatpush1.bf16.msra.mxu0 0
        %1234 = vmatprep.mubr.bf16.mxu0 0
        %1235 = vmatmul.mubr.bf16.gmra.mrb[0].mxu0 %v1197
        %v1236 = vpop.f32.mrb[0].mxu0
        %v1237 = vadd.f32 %v1169, %v1236
        %v1238 = vpop.f32.mrb[0].mxu0
        %v1239 = vpop.f32.mrb[0].mxu0
        %v1240 = vadd.f32 %v1169, %v1239
        %v1241 = vpop.f32.mrb[0].mxu0
        %1242 = vmatprep.mubr.bf16.mxu0 0
        %1243 = vmatmul.mubr.bf16.gmra.mrb[0].mxu0 %v1200
        %v1244 = vpop.f32.mrb[0].mxu0
        %v1245 = vadd.f32 %v1169, %v1244
        %v1246 = vpop.f32.mrb[0].mxu0
        %v1247 = vpop.f32.mrb[0].mxu0
        %v1248 = vadd.f32 %v1169, %v1247
        %v1249 = vpop.f32.mrb[0].mxu0
        %1250 = vdwg.mxu0
        %1251 = vmax.xlane.f32.xlu0 %v1237
        %v1252 = vpop.xlane.xlu0 %1251
        %1253 = vmax.xlane.f32.xlu0 %v1240
        %v1254 = vpop.xlane.xlu0 %1253
        %1255 = vmax.xlane.f32.xlu0 %v1245
        %v1256 = vpop.xlane.xlu0 %1255
        %1257 = vmax.xlane.f32.xlu0 %v1248
        %v1258 = vpop.xlane.xlu0 %1257
        %v1259 = vsub.f32 %v1237, %v1252
        %v1260 = vsub.f32 %v1240, %v1254
        %v1261 = vsub.f32 %v1245, %v1256
        %v1262 = vsub.f32 %v1248, %v1258
        %v1263 = vmul.f32 %v1259, 1.442695
        %v1264 = vpow.pop %v1263
        %v1265 = vmul.f32 %v1260, 1.442695
        %v1266 = vpow.pop %v1265
        %v1267 = vmul.f32 %v1261, 1.442695
        %v1268 = vpow.pop %v1267
        %v1269 = vmul.f32 %v1262, 1.442695
        %v1270 = vpow.pop %v1269
        %1271 = vadd.xlane.f32.xlu0 %v1264
        %v1272 = vpop.xlane.xlu0 %1271
        %1273 = vadd.xlane.f32.xlu0 %v1266
        %v1274 = vpop.xlane.xlu0 %1273
        %1275 = vadd.xlane.f32.xlu0 %v1268
        %v1276 = vpop.xlane.xlu0 %1275
        %1277 = vadd.xlane.f32.xlu0 %v1270
        %v1278 = vpop.xlane.xlu0 %1277
        %v1279 = vrcp.pop %v1272
        %v1280 = vrcp.pop %v1274
        %v1281 = vrcp.pop %v1276
        %v1282 = vrcp.pop %v1278
        %v1283 = vmul.f32 %v1264, %v1279
        %v1284 = vmul.f32 %v1266, %v1280
        %v1285 = vmul.f32 %v1268, %v1281
        %v1286 = vmul.f32 %v1270, %v1282
        %1287 = vst [vmem:[%s341] sm:$0xff] %v1283
        %1288 = vst [vmem:[%s341 + $0x8] sm:$0xff] %v1284
        %1289 = vst [vmem:[%s341 + $0x10] sm:$0xff] %v1285
        %1290 = vst [vmem:[%s341 + $0x18] sm:$0xff] %v1286
        %s1291 = sand.u32 %s226, 1
        %s1292 = scalar_lea.sflag [#allocation4], %s1291
        %s1293 = sand.u32 %s226, 1
        %s1294 = smul.addr %s1293, 32
        %s1295 = scalar_lea.vmem [#allocation5], %s1294
        // Predicated region
        $region61: #{tpu_custom_call.1} parent=55 // pred_check
          %p1296 = pneg %p236
        $region62: #{tpu_custom_call.1} parent=55 // pred_check_branch
          %1298 = sbr.rel (%p1296) target = $region64
        $region63: #{tpu_custom_call.1} parent=55 // pred_region
          %s1299 = smul.u32 4, %s24
          %s1301 = ssub.s32 512, 512
          %1302 = vsyncadd %s1292, %s1301
          %s1303 = smul.addr %s1299, 128
          %s1304 = scalar_lea.hbm %s9, %s1303
          %s1305 = sshll.u32 %s1295, 4
          %s1306 = int_to_ptr.vmem [resolvable:$true] %s1305
          %1311 = dma.vmem_to_hbm [thread:$0]  %s1306, 512, %s1304, %s1292, 128, 128, 8
        $region64: #{tpu_custom_call.1} parent=55 // pred_fallthru
          _
      $region56: #{tpu_custom_call.1} parent=5 // pred_fallthru
        _
      %p1312 = scmp.le.s32.totalorder 2, %s19
      // Predicated region
      $region65: #{tpu_custom_call.1} parent=5 // pred_check
        %p1313 = pneg %p1312
      $region66: #{tpu_custom_call.1} parent=5 // pred_check_branch
        %1315 = sbr.rel (%p1313) target = $region68
      $region67: #{tpu_custom_call.1} parent=5 // pred_region
        %s1316 = ssub.s32 %s19, 2
        // Predicated region
        $region69: #{tpu_custom_call.1} parent=67 // pred_check
          %p1317 = pneg %p242
        $region70: #{tpu_custom_call.1} parent=67 // pred_check_branch
          %1319 = sbr.rel (%p1317) target = $region72
        $region71: #{tpu_custom_call.1} parent=67 // pred_region
          %s1320 = sand.u32 %s227, 1
          %s1321 = scalar_lea.sflag [#allocation4], %s1320
          %s1322 = sand.u32 %s227, 1
          %s1323 = smul.addr %s1322, 32
          %s1324 = scalar_lea.vmem [#allocation5], %s1323
          %1325 = dma.done %s1321, 512
        $region72: #{tpu_custom_call.1} parent=67 // pred_fallthru
          _
      $region68: #{tpu_custom_call.1} parent=5 // pred_fallthru
        _
    $region6: #{tpu_custom_call.1} parent=1 // loop_footer
      %s23 = sadd.s32 1, %s19
    $region7: #{tpu_custom_call.1} parent=1 // loop_footer_branch
      %18 = sbr.rel target = $region3
    $region8: #{tpu_custom_call.1} parent=1 // loop_exit
      _
    %1326 = vsyncpa [#allocation3], 1
    %s1327 = scalar_lea.sflag [#allocation3], 1
    %1328 = vsyncpa %s1327, 1
    %1329 = vsyncpa [#allocation4], 1
    %s1330 = scalar_lea.sflag [#allocation4], 1
    %1331 = vsyncpa %s1330, 1

</llo_original>
